<compile_context>
chip_gen: v6e
topology: v6e:2x2x1
jax: 0.10.0
libtpu: 0.0.40
codegen_flags: <defaults>
</compile_context>

<pallas_src>
import math

import jax
import jax.numpy as jnp
from jax.experimental import pallas as pl
from jax.experimental.pallas import tpu as pltpu


def _round_up(v: int, m: int) -> int:
    return -(-v // m) * m


def _vmem_capacity_bytes() -> int:
    try:
        info = pltpu.get_tpu_info()
        cap = getattr(info, "vmem_capacity_bytes", None)
        if cap:
            return int(cap)
    except Exception:
        pass
    return 64 * 1024 * 1024  # conservative (v7x per-TC)


# --------------------------------------------------------------------------
# Kernels
# --------------------------------------------------------------------------
def _kernel_single_k(x_ref, w_ref, b_ref, o_ref):
    # x: (tm, K)   w: (1, K, tn)   b: (1, 1, tn)   o: (tm, tn)
    acc = jnp.dot(x_ref[...], w_ref[0], preferred_element_type=jnp.float32)
    o_ref[...] = (acc + b_ref[0].astype(jnp.float32)).astype(o_ref.dtype)


def _kernel_multi_k_f32out(x_ref, w_ref, b_ref, o_ref):
    # f32 output block is resident across the K axis -> accumulate in place,
    # no extra VMEM scratch and no copy at flush.
    k = pl.program_id(3)

    @pl.when(k == 0)
    def _init():
        o_ref[...] = jnp.broadcast_to(b_ref[0].astype(jnp.float32), o_ref.shape)

    o_ref[...] += jnp.dot(x_ref[...], w_ref[0], preferred_element_type=jnp.float32)


def _kernel_multi_k_scratch(x_ref, w_ref, b_ref, o_ref, acc_ref):
    # Low-precision output: accumulate in an f32 VMEM scratch, cast at flush.
    k = pl.program_id(3)

    @pl.when(k == 0)
    def _init():
        acc_ref[...] = jnp.broadcast_to(b_ref[0].astype(jnp.float32), acc_ref.shape)

    acc_ref[...] += jnp.dot(x_ref[...], w_ref[0], preferred_element_type=jnp.float32)

    @pl.when(k == pl.num_programs(3) - 1)
    def _flush():
        o_ref[...] = acc_ref[...].astype(o_ref.dtype)


# --------------------------------------------------------------------------
# Wrapper
# --------------------------------------------------------------------------
def _est_vmem_bytes(tm, tk, tn, x_bytes, w_bytes, o_bytes, need_scratch):
    est = 2 * tm * tk * x_bytes       # double-buffered activation tile
    est += 2 * tk * tn * w_bytes      # double-buffered weight tile
    est += 2 * 8 * tn * 4             # bias tile (sublane-padded), double-buffered
    est += 2 * tm * tn * o_bytes      # double-buffered output tile
    if need_scratch:
        est += tm * tn * 4            # resident f32 accumulator
    return est


def column_sharded_linear(
    x,
    weight_shards,
    bias_shards=None,
    *,
    compute_dtype=jnp.bfloat16,
    _force_tk=None,
):
    """ColumnShardedLinear forward with gather_output=True.

    x             : (..., K)
    weight_shards : (G, shard_out, K)   per-rank weight shards (PyTorch layout)
    bias_shards   : (G, shard_out)      per-rank bias shards (or None)
    compute_dtype : dtype for x/weights on the MXU (default bf16); None keeps
                    the input dtype.  Accumulation is always f32; the output
                    keeps x.dtype.
    returns       : (..., G * shard_out)
    """
    orig_shape = x.shape
    K = orig_shape[-1]
    G, shard_out, Kw = weight_shards.shape
    assert Kw == K, "weight shard input dim must match x's last dim"
    out_dtype = x.dtype
    out_is_f32 = jnp.dtype(out_dtype) == jnp.dtype(jnp.float32)

    if bias_shards is None:
        bias_shards = jnp.zeros((G, shard_out), dtype=jnp.float32)

    x2 = x.reshape(-1, K)
    M = x2.shape[0]

    if compute_dtype is not None:
        x2 = x2.astype(compute_dtype)
        weight_shards = weight_shards.astype(compute_dtype)

    x_bytes = jnp.dtype(x2.dtype).itemsize
    w_bytes = jnp.dtype(weight_shards.dtype).itemsize
    o_bytes = jnp.dtype(out_dtype).itemsize

    # ---- N tiling: each shard's column slab stays lane-dense (mult of 128) --
    pad_n = (-shard_out) % 128
    shard_out_p = shard_out + pad_n
    if shard_out_p <= 1024:
        tn = shard_out_p                     # single, full-width shard slab
    elif shard_out_p % 512 == 0:
        tn = 512
    elif shard_out_p % 256 == 0:
        tn = 256
    else:
        tn = 128
    n_n = shard_out_p // tn

    # ---- generation-aware VMEM budget (v5e/v6e ~102 MiB, v7x ~51 MiB) -------
    vmem_cap = _vmem_capacity_bytes()
    vmem_budget = int(vmem_cap * 0.8)

    # ---- M tiling (no wrapper pad: ragged edge handled by partial blocks) ---
    M8 = _round_up(M, 8)
    tm_cands = [M8] if M8 <= 512 else [512, 256, 128]

    # ---- K tiling: prefer a single K step (tk = K) -------------------------
    if _force_tk is not None:
        tk_cands = [_force_tk]
    else:
        tk_cands = [K] + [c for c in (2048, 1024, 512) if c < K]

    best = None
    fallback = None
    for tm_ in tm_cands:
        for tk_ in tk_cands:
            tk_ = min(tk_, K)
            n_k_ = 1 if tk_ == K else -(-K // tk_)
            need_scratch_ = (n_k_ > 1) and (not out_is_f32)
            est_ = _est_vmem_bytes(tm_, tk_, tn, x_bytes, w_bytes, o_bytes, need_scratch_)
            cfg = (tm_, tk_, n_k_, need_scratch_, est_)
            if fallback is None or est_ < fallback[4]:
                fallback = cfg
            if est_ <= vmem_budget and best is None:
                best = cfg
        if best is not None:
            break
    if best is None:
        best = fallback
    tm, tk, n_k, need_scratch, est = best

    n_m = pl.cdiv(M, tm)
    K_pad = tk * n_k

    # ---- one-time weight prep: pad shard_out, transpose to (G, K, n) -------
    if pad_n:
        weight_shards = jnp.pad(weight_shards, ((0, 0), (0, pad_n), (0, 0)))
        bias_shards = jnp.pad(bias_shards, ((0, 0), (0, pad_n)))
    w_t = jnp.swapaxes(weight_shards, 1, 2)          # (G, K, shard_out_p)
    if K_pad != K:
        x2 = jnp.pad(x2, ((0, 0), (0, K_pad - K)))
        w_t = jnp.pad(w_t, ((0, 0), (0, K_pad - K), (0, 0)))
    bias3 = bias_shards.reshape(G, 1, shard_out_p)

    vmem_limit = int(min(max(int(est * 1.3), 32 * 1024 * 1024), int(vmem_cap * 0.9)))

    if n_k == 1:
        grid = (G, n_m, n_n)
        in_specs = [
            pl.BlockSpec((tm, tk), lambda g, i, j: (i, 0)),
            pl.BlockSpec((1, tk, tn), lambda g, i, j: (g, 0, j)),
            pl.BlockSpec((1, 1, tn), lambda g, i, j: (g, 0, j)),
        ]
        out_specs = pl.BlockSpec((tm, tn), lambda g, i, j: (i, g * n_n + j))
        kernel = _kernel_single_k
        scratch = []
        dims = ("parallel", "parallel", "parallel")
    else:
        grid = (G, n_m, n_n, n_k)
        in_specs = [
            pl.BlockSpec((tm, tk), lambda g, i, j, k: (i, k)),
            pl.BlockSpec((1, tk, tn), lambda g, i, j, k: (g, k, j)),
            pl.BlockSpec((1, 1, tn), lambda g, i, j, k: (g, 0, j)),
        ]
        out_specs = pl.BlockSpec((tm, tn), lambda g, i, j, k: (i, g * n_n + j))
        dims = ("parallel", "parallel", "parallel", "arbitrary")
        if need_scratch:
            kernel = _kernel_multi_k_scratch
            scratch = [pltpu.VMEM((tm, tn), jnp.float32)]
        else:
            kernel = _kernel_multi_k_f32out
            scratch = []

    out = pl.pallas_call(
        kernel,
        out_shape=jax.ShapeDtypeStruct((M, G * shard_out_p), out_dtype),
        grid=grid,
        in_specs=in_specs,
        out_specs=out_specs,
        scratch_shapes=scratch,
        compiler_params=pltpu.CompilerParams(
            dimension_semantics=dims,
            vmem_limit_bytes=vmem_limit,
        ),
    )(x2, w_t, bias3)

    # Strip the shard_out padding (fused gather already put every rank's slab
    # at the right column offset).
    if pad_n:
        out = out.reshape(M, G, shard_out_p)[:, :, :shard_out].reshape(
            M, G * shard_out
        )
    return out.reshape(*orig_shape[:-1], G * shard_out)


# --------------------------------------------------------------------------
# Parameter init matching fairseq2's _init_uniform
# --------------------------------------------------------------------------
def init_params(key, input_dim, output_dim, gang_size, dtype=jnp.float32):
    """kaiming_uniform_(a=sqrt(5)) on the FULL (output_dim, input_dim) weight
    -> U(-1/sqrt(fan_in), 1/sqrt(fan_in)); same bound for bias; then split
    into gang_size shards along dim 0 (one shard per rank)."""
    assert output_dim % gang_size == 0, "output_dim must be a multiple of gang_size"
    kw, kb = jax.random.split(key)
    bound = 1.0 / math.sqrt(input_dim)
    full_weight = jax.random.uniform(
        kw, (output_dim, input_dim), dtype=dtype, minval=-bound, maxval=bound
    )
    full_bias = jax.random.uniform(
        kb, (output_dim,), dtype=dtype, minval=-bound, maxval=bound
    )
    shard_out = output_dim // gang_size
    weight_shards = full_weight.reshape(gang_size, shard_out, input_dim)
    bias_shards = full_bias.reshape(gang_size, shard_out)
    return full_weight, full_bias, weight_shards, bias_shards


# --------------------------------------------------------------------------
# Self-test
# --------------------------------------------------------------------------
def _run_case(key, batch, seq, input_dim, output_dim, gang_size, *,
              compute_dtype, x_dtype=jnp.float32, force_tk=None,
              atol=1e-4, rtol=1e-4):
    kx, kp = jax.random.split(key)
    x = jax.random.normal(kx, (batch, seq, input_dim), dtype=jnp.float32).astype(x_dtype)
    full_w, full_b, w_shards, b_shards = init_params(kp, input_dim, output_dim, gang_size)

    y = column_sharded_linear(
        x, w_shards, b_shards, compute_dtype=compute_dtype, _force_tk=force_tk
    )
    y = jax.block_until_ready(y)

    # Reference with matching compute precision (f32 accumulation).
    cx = x if compute_dtype is None else x.astype(compute_dtype)
    cw = full_w if compute_dtype is None else full_w.astype(compute_dtype)
    y_ref = cx.astype(jnp.float32) @ cw.astype(jnp.float32).T + full_b

    assert y.shape == (batch, seq, output_dim), y.shape
    assert jnp.allclose(y.astype(jnp.float32), y_ref, atol=atol, rtol=rtol), \
        "mismatch vs reference"


if __name__ == "__main__":
    key = jax.random.PRNGKey(0)
    k1, k2, k3, k4 = jax.random.split(key, 4)

    # 1) Aligned case, exact f32 compute (no cast): fully lane-dense fused
    #    gather, single K step, tight tolerance.
    _run_case(k1, batch=2, seq=8, input_dim=128, output_dim=256, gang_size=2,
              compute_dtype=None, atol=1e-4, rtol=1e-4)

    # 2) Unaligned case with the default bf16 compute path (shard_out padding
    #    fallback), looser tolerance for the bf16 operand rounding.
    _run_case(k2, batch=2, seq=8, input_dim=32, output_dim=64, gang_size=2,
              compute_dtype=jnp.bfloat16, atol=2e-2, rtol=2e-2)

    # 3) Forced K split, f32 output: exercises the in-place f32 accumulation
    #    kernel (no scratch).
    _run_case(k3, batch=2, seq=8, input_dim=256, output_dim=256, gang_size=2,
              compute_dtype=None, force_tk=128, atol=1e-4, rtol=1e-4)

    # 4) Forced K split with bf16 input/output: exercises the f32 VMEM-scratch
    #    accumulation kernel.
    _run_case(k4, batch=2, seq=8, input_dim=256, output_dim=256, gang_size=2,
              compute_dtype=jnp.bfloat16, x_dtype=jnp.bfloat16, force_tk=128,
              atol=3e-2, rtol=3e-2)

    print("KERNEL_OK")
</pallas_src>

<mosaic_0001>
module attributes {stable_mosaic.version = 11 : i64} {
  func.func @_kernel_single_k(%arg0: i32, %arg1: i32, %arg2: i32, %arg3: memref<16x128xf32, #tpu.memory_space<vmem>>, %arg4: memref<1x128x128xf32, #tpu.memory_space<vmem>>, %arg5: memref<1x1x128xf32, #tpu.memory_space<vmem>>, %arg6: memref<16x128xf32, #tpu.memory_space<vmem>>) attributes {dimension_semantics = [#tpu.dimension_semantics<parallel>, #tpu.dimension_semantics<parallel>, #tpu.dimension_semantics<parallel>], iteration_bounds = array<i64: 2, 1, 1>, scalar_prefetch = 0 : i64, scratch_operands = 0 : i64, tpu.core_type = #tpu.core_type<tc>, window_params = [{transform_indices = @transform_0, window_bounds = array<i64: 16, 128>}, {transform_indices = @transform_1, window_bounds = array<i64: 1, 128, 128>}, {transform_indices = @transform_2, window_bounds = array<i64: 1, 1, 128>}, {transform_indices = @transform_3, window_bounds = array<i64: 16, 128>}]} {
    %c0 = arith.constant 0 : index
    %c0_0 = arith.constant 0 : index
    %0 = vector.load %arg3[%c0, %c0_0] : memref<16x128xf32, #tpu.memory_space<vmem>>, vector<16x128xf32>
    %c0_1 = arith.constant 0 : index
    %c0_2 = arith.constant 0 : index
    %c0_3 = arith.constant 0 : index
    %1 = vector.load %arg4[%c0_1, %c0_2, %c0_3] : memref<1x128x128xf32, #tpu.memory_space<vmem>>, vector<1x128x128xf32>
    %2 = vector.shape_cast %1 : vector<1x128x128xf32> to vector<128x128xf32>
    %cst = arith.constant dense<0.000000e+00> : vector<16x128xf32>
    %3 = tpu.matmul %0, %2, %cst {dimension_numbers = #tpu.dot_dimension_numbers<[1], [0], [0], [1], [0, 0, 1, 1], [], []>} : vector<16x128xf32>, vector<128x128xf32>, vector<16x128xf32> -> vector<16x128xf32>
    %c0_4 = arith.constant 0 : index
    %c0_5 = arith.constant 0 : index
    %c0_6 = arith.constant 0 : index
    %4 = vector.load %arg5[%c0_4, %c0_5, %c0_6] : memref<1x1x128xf32, #tpu.memory_space<vmem>>, vector<1x1x128xf32>
    %5 = vector.shape_cast %4 : vector<1x1x128xf32> to vector<1x128xf32>
    %6 = vector.broadcast %5 : vector<1x128xf32> to vector<16x128xf32>
    %7 = arith.addf %3, %6 : vector<16x128xf32>
    %c0_7 = arith.constant 0 : index
    %c0_8 = arith.constant 0 : index
    %8 = vector.load %arg6[%c0_7, %c0_8] : memref<16x128xf32, #tpu.memory_space<vmem>>, vector<16x128xf32>
    tpu.vector_store %arg6[%c0_7, %c0_8], %7 {strides = array<i32>} : memref<16x128xf32, #tpu.memory_space<vmem>>, vector<16x128xf32>,
    return
  }
  func.func @transform_0(%arg0: i32, %arg1: i32, %arg2: i32) -> (i32, i32) {
    %c0_i32 = arith.constant 0 : i32
    %c0_i32_0 = arith.constant 0 : i32
    return %arg1, %c0_i32 : i32, i32
  }
  func.func @transform_1(%arg0: i32, %arg1: i32, %arg2: i32) -> (i32, i32, i32) {
    %c0_i32 = arith.constant 0 : i32
    %c0_i32_0 = arith.constant 0 : i32
    return %arg0, %c0_i32, %arg2 : i32, i32, i32
  }
  func.func @transform_2(%arg0: i32, %arg1: i32, %arg2: i32) -> (i32, i32, i32) {
    %c0_i32 = arith.constant 0 : i32
    %c0_i32_0 = arith.constant 0 : i32
    return %arg0, %c0_i32, %arg2 : i32, i32, i32
  }
  func.func @transform_3(%arg0: i32, %arg1: i32, %arg2: i32) -> (i32, i32) {
    %c1_i32 = arith.constant 1 : i32
    %0 = arith.muli %arg0, %c1_i32 : i32
    %1 = arith.addi %0, %arg2 : i32
    %c0_i32 = arith.constant 0 : i32
    return %arg1, %1 : i32, i32
  }
}

</mosaic_0001>

<llo_original>
// kernel: tpu_custom_call.1
$region0: #{tpu_custom_call.1}
  #allocation0 [shape = 'u32[]', space=smem, size = 0x4, offset = 0x4, fixed_abs, tag = 'smem constant byte address 0x4 - core index']
  #allocation1 [shape = 'u32[144,128]{1,0:T(1,128)}', space=vmem, size = 0x12000, scoped, tag = 'internal scratch']
  %s0 = inlined_call_operand.hbm [shape: f32[16,128], index: 0, kind: input, shape index: {}]
  %s1 = inlined_call_operand.hbm [shape: f32[2,128,128], index: 1, kind: input, shape index: {}]
  %s2 = inlined_call_operand.vmem [shape: f32[2,1,128], index: 2, kind: input, shape index: {}]
  %s3 = inlined_call_operand.hbm [shape: f32[16,256], index: 3, kind: output, shape index: {}]
  %s4 = sld [smem:[#allocation0]]
  $region53: #{tpu_custom_call.1} parent=0
    _
  %s6 = ssub.s32 1, %s4
  %s7 = scalar_select 0, %s6, %s4
  $region1: #{tpu_custom_call.1} parent=0
    #allocation2 [shape = 'u8[8192]{0}', space=vmem, size = 0x2000, scoped, tag = 'input window, operand 0, single buffered']
    #allocation3 [shape = 's32[2]{0}', space=sflag, size = 0x8, scoped, tag = 'scoped memory for tpu_custom_call.1']
    #allocation4 [shape = 's32[2]{0}', space=sflag, size = 0x8, scoped, tag = 'scoped memory for tpu_custom_call.1']
    #allocation5 [shape = 'u8[131072]{0}', space=vmem, size = 0x20000, scoped, tag = 'input window, operand 1']
    #allocation6 [shape = 's32[2]{0}', space=sflag, size = 0x8, scoped, tag = 'scoped memory for tpu_custom_call.1']
    #allocation7 [shape = 'u8[16384]{0}', space=vmem, size = 0x4000, scoped, tag = 'output window, operand 0']
    %8 = vsyncpa [#allocation3], 0
    %9 = vsyncpa [#allocation6], 0
    %s10 = scalar_lea.sflag [#allocation6], 1
    %11 = vsyncpa %s10, 0
    %12 = vsyncpa [#allocation4], 0
    %s13 = scalar_lea.sflag [#allocation4], 1
    %14 = vsyncpa %s13, 0
    loop: start=0, step=1, limit=4
    $region2: #{tpu_custom_call.1} parent=1 // loop_pre_header
      _
    $region3: #{tpu_custom_call.1} parent=1 // loop_header
      %s16 = sphi 0, %s20
      %p17 = scmp.ge.s32.totalorder %s16, 4
      %s23 = sphi 0, %s42
      %s24 = sphi 0, %s38
      %s25 = sphi 0, %s34
      %s26 = sphi 0, %s23
      %s27 = sphi 0, %s24
      %s28 = sphi 0, %s25
      %s29 = sphi 0, %s26
      %s30 = sphi 0, %s27
      %s31 = sphi 0, %s28
      %s45 = sphi 0, %s47
      %s48 = sphi 0, %s45
      %s49 = sphi 0, %s48
      %s65 = sphi 0, %s49
      %s73 = sphi 0, %s75
      %s76 = sphi 0, %s73
      %s77 = sphi 0, %s76
      %s93 = sphi 0, %s77
      %s101 = sphi 0, %s103
      %s104 = sphi 0, %s101
      %s105 = sphi 0, %s104
      %s121 = sphi 0, %s105
      %s131 = sphi 0, %s133
      %s134 = sphi 0, %s131
      %s135 = sphi 0, %s134
      %s151 = sphi 0, %s135
    $region4: #{tpu_custom_call.1} parent=1 // loop_header_branch
      %19 = sbr.rel (%p17) target = $region8
    $region5: #{tpu_custom_call.1} parent=1 // loop_body
      %s21 = ssub.s32 %s16, 1
      %s22 = ssub.s32 %s16, 2
      %s32 = sadd.s32 1, %s25
      %p33 = scmp.ge.s32.totalorder %s32, 1
      %s34 = scalar_select %p33, 0, %s32
      %s35 = sadd.s32 1, %s24
      %s36 = scalar_select %p33, %s35, %s24
      %p37 = scmp.ge.s32.totalorder %s36, 1
      %s38 = scalar_select %p37, 0, %s36
      %s39 = sadd.s32 1, %s23
      %s40 = scalar_select %p37, %s39, %s23
      %p41 = scmp.ge.s32.totalorder %s40, 2
      %s42 = scalar_select %p41, 0, %s40
      %s43 = ssub.s32 %s24, %s38
      %p44 = scmp.eq.s32.totalorder %s43, 0
      %s46 = sadd.s32 %s45, 1
      %s47 = scalar_select %p44, %s45, %s46
      %p50 = pneg %p44
      %p51 = scmp.eq.s32.totalorder %s16, 1
      %p52 = por %p50, %p51
      %p53 = scmp.ne.s32.totalorder %s45, %s48
      %p54 = scmp.eq.s32.totalorder %s16, 0
      %p55 = por %p53, %p54
      %p56 = scmp.ne.s32.totalorder %s45, %s48
      %p57 = scmp.eq.s32.totalorder %s21, 1
      %p58 = por %p56, %p57
      %p59 = scmp.ne.s32.totalorder %s48, %s49
      %p60 = scmp.eq.s32.totalorder %s21, 0
      %p61 = por %p59, %p60
      %p62 = scmp.ne.s32.totalorder %s48, %s49
      %p63 = scmp.eq.s32.totalorder %s22, 1
      %p64 = por %p62, %p63
      %p66 = scmp.ne.s32.totalorder %s49, %s65
      %p67 = scmp.eq.s32.totalorder %s22, 0
      %p68 = por %p66, %p67
      %s69 = ssub.s32 %s23, %s42
      %s70 = ssub.s32 %s25, %s34
      %s71 = sor.u32 %s69, %s70
      %p72 = scmp.eq.s32.totalorder %s71, 0
      %s74 = sadd.s32 %s73, 1
      %s75 = scalar_select %p72, %s73, %s74
      %p78 = pneg %p72
      %p79 = scmp.eq.s32.totalorder %s16, 1
      %p80 = por %p78, %p79
      %p81 = scmp.ne.s32.totalorder %s73, %s76
      %p82 = scmp.eq.s32.totalorder %s16, 0
      %p83 = por %p81, %p82
      %p84 = scmp.ne.s32.totalorder %s73, %s76
      %p85 = scmp.eq.s32.totalorder %s21, 1
      %p86 = por %p84, %p85
      %p87 = scmp.ne.s32.totalorder %s76, %s77
      %p88 = scmp.eq.s32.totalorder %s21, 0
      %p89 = por %p87, %p88
      %p90 = scmp.ne.s32.totalorder %s76, %s77
      %p91 = scmp.eq.s32.totalorder %s22, 1
      %p92 = por %p90, %p91
      %p94 = scmp.ne.s32.totalorder %s77, %s93
      %p95 = scmp.eq.s32.totalorder %s22, 0
      %p96 = por %p94, %p95
      %s97 = ssub.s32 %s23, %s42
      %s98 = ssub.s32 %s25, %s34
      %s99 = sor.u32 %s97, %s98
      %p100 = scmp.eq.s32.totalorder %s99, 0
      %s102 = sadd.s32 %s101, 1
      %s103 = scalar_select %p100, %s101, %s102
      %p106 = pneg %p100
      %p107 = scmp.eq.s32.totalorder %s16, 1
      %p108 = por %p106, %p107
      %p109 = scmp.ne.s32.totalorder %s101, %s104
      %p110 = scmp.eq.s32.totalorder %s16, 0
      %p111 = por %p109, %p110
      %p112 = scmp.ne.s32.totalorder %s101, %s104
      %p113 = scmp.eq.s32.totalorder %s21, 1
      %p114 = por %p112, %p113
      %p115 = scmp.ne.s32.totalorder %s104, %s105
      %p116 = scmp.eq.s32.totalorder %s21, 0
      %p117 = por %p115, %p116
      %p118 = scmp.ne.s32.totalorder %s104, %s105
      %p119 = scmp.eq.s32.totalorder %s22, 1
      %p120 = por %p118, %p119
      %p122 = scmp.ne.s32.totalorder %s105, %s121
      %p123 = scmp.eq.s32.totalorder %s22, 0
      %p124 = por %p122, %p123
      %s125 = sadd.s32 %s23, %s25
      %s126 = sadd.s32 %s42, %s34
      %s127 = ssub.s32 %s24, %s38
      %s128 = ssub.s32 %s125, %s126
      %s129 = sor.u32 %s127, %s128
      %p130 = scmp.eq.s32.totalorder %s129, 0
      %s132 = sadd.s32 %s131, 1
      %s133 = scalar_select %p130, %s131, %s132
      %p136 = pneg %p130
      %p137 = scmp.eq.s32.totalorder %s16, 1
      %p138 = por %p136, %p137
      %p139 = scmp.ne.s32.totalorder %s131, %s134
      %p140 = scmp.eq.s32.totalorder %s16, 0
      %p141 = por %p139, %p140
      %p142 = scmp.ne.s32.totalorder %s131, %s134
      %p143 = scmp.eq.s32.totalorder %s21, 1
      %p144 = por %p142, %p143
      %p145 = scmp.ne.s32.totalorder %s134, %s135
      %p146 = scmp.eq.s32.totalorder %s21, 0
      %p147 = por %p145, %p146
      %p148 = scmp.ne.s32.totalorder %s134, %s135
      %p149 = scmp.eq.s32.totalorder %s22, 1
      %p150 = por %p148, %p149
      %p152 = scmp.ne.s32.totalorder %s135, %s151
      %p153 = scmp.eq.s32.totalorder %s22, 0
      %p154 = por %p152, %p153
      %p155 = scmp.le.s32.totalorder 1, %s16
      %p156 = scmp.lt.s32.totalorder %s16, 3
      %p157 = pnand %p155, %p156
      %p158 = pneg %p157
      // Predicated region
      $region9: #{tpu_custom_call.1} parent=5 // pred_check
        _
      $region10: #{tpu_custom_call.1} parent=5 // pred_check_branch
        %160 = sbr.rel (%p157) target = $region12
      $region11: #{tpu_custom_call.1} parent=5 // pred_region
        %s161 = ssub.s32 %s16, 1
        // Predicated region
        $region13: #{tpu_custom_call.1} parent=11 // pred_check
          %p162 = pneg %p61
        $region14: #{tpu_custom_call.1} parent=11 // pred_check_branch
          %164 = sbr.rel (%p162) target = $region16
        $region15: #{tpu_custom_call.1} parent=11 // pred_region
          %s165 = smul.u32 2, %s27
          %s167 = ssub.s32 256, 256
          %168 = vsyncadd [#allocation3], %s167
          %s169 = smul.addr %s165, 128
          %s170 = scalar_lea.hbm %s0, %s169
          %s171 = sshll.u32 [#allocation2], 4
          %s172 = int_to_ptr.vmem [resolvable:$true] %s171
          %177 = dma.hbm_to_vmem [thread:$0]  %s170, 256, %s172, [#allocation3], 128, 128, 8
        $region16: #{tpu_custom_call.1} parent=11 // pred_fallthru
          _
      $region12: #{tpu_custom_call.1} parent=5 // pred_fallthru
        _
      %p178 = scmp.lt.s32.totalorder %s16, 2
      // Predicated region
      $region17: #{tpu_custom_call.1} parent=5 // pred_check
        %p179 = pneg %p178
      $region18: #{tpu_custom_call.1} parent=5 // pred_check_branch
        %181 = sbr.rel (%p179) target = $region20
      $region19: #{tpu_custom_call.1} parent=5 // pred_region
        // Predicated region
        $region21: #{tpu_custom_call.1} parent=19 // pred_check
          %p182 = pneg %p83
        $region22: #{tpu_custom_call.1} parent=19 // pred_check_branch
          %184 = sbr.rel (%p182) target = $region24
        $region23: #{tpu_custom_call.1} parent=19 // pred_region
          %s185 = sand.u32 %s73, 1
          %s186 = scalar_lea.sflag [#allocation6], %s185
          %s187 = sand.u32 %s73, 1
          %s188 = smul.addr %s187, 128
          %s189 = scalar_lea.vmem [#allocation5], %s188
          %s191 = ssub.s32 2048, 2048
          %192 = vsyncadd %s186, %s191
          %s193 = smul.addr %s23, 16
          %s194 = sadd.s32 %s25, %s193
          %s195 = smul.addr %s194, 128
          %s196 = scalar_lea.hbm %s1, %s195
          %s197 = sshll.u32 %s189, 4
          %s198 = int_to_ptr.vmem [resolvable:$true] %s197
          %203 = dma.hbm_to_vmem [thread:$0]  %s196, 2048, %s198, %s186, 128, 128, 8
        $region24: #{tpu_custom_call.1} parent=19 // pred_fallthru
          _
        // Predicated region
        $region25: #{tpu_custom_call.1} parent=19 // pred_check
          %p204 = pneg %p111
        $region26: #{tpu_custom_call.1} parent=19 // pred_check_branch
          %206 = sbr.rel (%p204) target = $region28
        $region27: #{tpu_custom_call.1} parent=19 // pred_region
          %p207 = scmp.lt.s32.totalorder %s23, 1
          %s208 = scalar_select %p207, %s23, 1
          %p209 = scmp.lt.s32.totalorder %s25, 0
          %s210 = scalar_select %p209, %s25, 0
          %s211 = sadd.s32 %s210, %s208
          %s212 = scalar_lea.vmem %s2, %s211
        $region28: #{tpu_custom_call.1} parent=19 // pred_fallthru
          _
      $region20: #{tpu_custom_call.1} parent=5 // pred_fallthru
        _
      %p213 = scmp.le.s32.totalorder 1, %s16
      %p214 = scmp.lt.s32.totalorder %s16, 3
      %p215 = pnand %p213, %p214
      %p216 = pneg %p215
      // Predicated region
      $region29: #{tpu_custom_call.1} parent=5 // pred_check
        _
      $region30: #{tpu_custom_call.1} parent=5 // pred_check_branch
        %218 = sbr.rel (%p215) target = $region32
      $region31: #{tpu_custom_call.1} parent=5 // pred_region
        %s219 = ssub.s32 %s16, 1
        // Predicated region
        $region33: #{tpu_custom_call.1} parent=31 // pred_check
          %p220 = pneg %p61
        $region34: #{tpu_custom_call.1} parent=31 // pred_check_branch
          %222 = sbr.rel (%p220) target = $region36
        $region35: #{tpu_custom_call.1} parent=31 // pred_region
          %223 = dma.done [#allocation3], 256
        $region36: #{tpu_custom_call.1} parent=31 // pred_fallthru
          _
        %s224 = sand.u32 %s76, 1
        %s225 = scalar_lea.sflag [#allocation6], %s224
        %s226 = sand.u32 %s76, 1
        %s227 = smul.addr %s226, 128
        %s228 = scalar_lea.vmem [#allocation5], %s227
        // Predicated region
        $region37: #{tpu_custom_call.1} parent=31 // pred_check
          %p229 = pneg %p89
        $region38: #{tpu_custom_call.1} parent=31 // pred_check_branch
          %231 = sbr.rel (%p229) target = $region40
        $region39: #{tpu_custom_call.1} parent=31 // pred_region
          %232 = dma.done %s225, 2048
        $region40: #{tpu_custom_call.1} parent=31 // pred_fallthru
          _
        %p233 = pneg %p61
        %p234 = pneg %p58
        %s235 = sand.u32 %s76, 1
        %s236 = scalar_lea.sflag [#allocation6], %s235
        %s237 = sand.u32 %s76, 1
        %s238 = smul.addr %s237, 128
        %s239 = scalar_lea.vmem [#allocation5], %s238
        %p240 = pneg %p89
        %p241 = pneg %p86
        %p242 = scmp.lt.s32.totalorder %s26, 1
        %s243 = scalar_select %p242, %s26, 1
        %p244 = scmp.lt.s32.totalorder %s28, 0
        %s245 = scalar_select %p244, %s28, 0
        %s246 = sadd.s32 %s245, %s243
        %s247 = scalar_lea.vmem %s2, %s246
        %p248 = pneg %p117
        %p249 = pneg %p114
        %p250 = pneg %p147
        %p251 = pneg %p144
        %s252 = sand.u32 %s134, 1
        %s253 = scalar_lea.sflag [#allocation4], %s252
        %s254 = sand.u32 %s134, 1
        %s255 = smul.addr %s254, 16
        %s256 = scalar_lea.vmem [#allocation7], %s255
        %s257 = smul.u32 2, %s27
        %p258 = scmp.lt.s32.totalorder %s26, 1
        %s259 = scalar_select %p258, %s26, 1
        %p260 = scmp.lt.s32.totalorder %s28, 0
        %s261 = scalar_select %p260, %s28, 0
        %s262 = sadd.s32 %s261, %s259
        %s263 = scalar_lea.vmem %s2, %s262
        %s264 = sadd.s32 %s26, %s28
        %s265 = smul.u32 2, %s27
        %v266 = vld [vmem:[#allocation2] sm:$0xff]
        %v267 = vld [vmem:[#allocation2 + $0x8] sm:$0xff]
        %v268 = vld [vmem:[%s228] sm:$0xff]
        %v269 = vld [vmem:[%s228 + $0x8] sm:$0xff]
        %v270 = vld [vmem:[%s228 + $0x10] sm:$0xff]
        %v271 = vld [vmem:[%s228 + $0x18] sm:$0xff]
        %v272 = vld [vmem:[%s228 + $0x20] sm:$0xff]
        %v273 = vld [vmem:[%s228 + $0x28] sm:$0xff]
        %v274 = vld [vmem:[%s228 + $0x30] sm:$0xff]
        %v275 = vld [vmem:[%s228 + $0x38] sm:$0xff]
        %v276 = vld [vmem:[%s228 + $0x40] sm:$0xff]
        %v277 = vld [vmem:[%s228 + $0x48] sm:$0xff]
        %v278 = vld [vmem:[%s228 + $0x50] sm:$0xff]
        %v279 = vld [vmem:[%s228 + $0x58] sm:$0xff]
        %v280 = vld [vmem:[%s228 + $0x60] sm:$0xff]
        %v281 = vld [vmem:[%s228 + $0x68] sm:$0xff]
        %v282 = vld [vmem:[%s228 + $0x70] sm:$0xff]
        %v283 = vld [vmem:[%s228 + $0x78] sm:$0xff]
        %v284 = vld [vmem:[%s263] sm:$0x1]
        %v286 = vlaneseq
        %v287 = vshrl.u32 %v286, 7
        %v288 = vsub.s32 0, %v287
        %v289 = vrot.slane %v284, %v288
        %291 = vmatprep.subr.mxu0 0.0
        %292 = vmatpush1.msra.mxu0 %v283
        %293 = vmatprep.subr.mxu0 0.0
        %294 = vmatpush1.msra.mxu0 %v282
        %295 = vmatprep.subr.mxu0 0.0
        %296 = vmatpush1.msra.mxu0 %v281
        %297 = vmatprep.subr.mxu0 0.0
        %298 = vmatpush1.msra.mxu0 %v280
        %299 = vmatprep.subr.mxu0 0.0
        %300 = vmatpush1.msra.mxu0 %v279
        %301 = vmatprep.subr.mxu0 0.0
        %302 = vmatpush1.msra.mxu0 %v278
        %303 = vmatprep.subr.mxu0 0.0
        %304 = vmatpush1.msra.mxu0 %v277
        %305 = vmatprep.subr.mxu0 0.0
        %306 = vmatpush1.msra.mxu0 %v276
        %307 = vmatprep.subr.mxu0 0.0
        %308 = vmatpush1.msra.mxu0 %v275
        %309 = vmatprep.subr.mxu0 0.0
        %310 = vmatpush1.msra.mxu0 %v274
        %311 = vmatprep.subr.mxu0 0.0
        %312 = vmatpush1.msra.mxu0 %v273
        %313 = vmatprep.subr.mxu0 0.0
        %314 = vmatpush1.msra.mxu0 %v272
        %315 = vmatprep.subr.mxu0 0.0
        %316 = vmatpush1.msra.mxu0 %v271
        %317 = vmatprep.subr.mxu0 0.0
        %318 = vmatpush1.msra.mxu0 %v270
        %319 = vmatprep.subr.mxu0 0.0
        %320 = vmatpush1.msra.mxu0 %v269
        %321 = vmatprep.subr.mxu0 0.0
        %322 = vmatpush1.msra.mxu0 %v268
        %323 = vmatprep.subr.mxu0 0.0
        %324 = vmatpush2.msra.mxu0 0.0
        %325 = vmatprep.subr.mxu0 0.0
        %326 = vmatpush2.msra.mxu0 0.0
        %327 = vmatprep.subr.mxu0 0.0
        %328 = vmatpush2.msra.mxu0 0.0
        %329 = vmatprep.subr.mxu0 0.0
        %330 = vmatpush2.msra.mxu0 0.0
        %331 = vmatprep.subr.mxu0 0.0
        %332 = vmatpush2.msra.mxu0 0.0
        %333 = vmatprep.subr.mxu0 0.0
        %334 = vmatpush2.msra.mxu0 0.0
        %335 = vmatprep.subr.mxu0 0.0
        %336 = vmatpush2.msra.mxu0 0.0
        %337 = vmatprep.subr.mxu0 0.0
        %338 = vmatpush2.msra.mxu0 0.0
        %339 = vmatprep.subr.mxu0 0.0
        %340 = vmatpush2.msra.mxu0 0.0
        %341 = vmatprep.subr.mxu0 0.0
        %342 = vmatpush2.msra.mxu0 0.0
        %343 = vmatprep.subr.mxu0 0.0
        %344 = vmatpush2.msra.mxu0 0.0
        %345 = vmatprep.subr.mxu0 0.0
        %346 = vmatpush2.msra.mxu0 0.0
        %347 = vmatprep.subr.mxu0 0.0
        %348 = vmatpush2.msra.mxu0 0.0
        %349 = vmatprep.subr.mxu0 0.0
        %350 = vmatpush2.msra.mxu0 0.0
        %351 = vmatprep.subr.mxu0 0.0
        %352 = vmatpush2.msra.mxu0 0.0
        %353 = vmatprep.subr.mxu0 0.0
        %354 = vmatpush2.msra.mxu0 0.0
        %355 = vmatprep.mubr.f32.mxu0 0.0
        %356 = vmatmul.mubr.f32.gmra.mxu0 %v266
        %v357 = vpop.f32.mrf.mxu0
        %v358 = vadd.f32 %v289, %v357
        %v359 = vpop.f32.mrf.mxu0
        %360 = vmatprep.mubr.f32.mxu0 0.0
        %361 = vmatmul.mubr.f32.gmra.mxu0 %v267
        %v362 = vpop.f32.mrf.mxu0
        %v363 = vadd.f32 %v289, %v362
        %v364 = vpop.f32.mrf.mxu0
        %365 = vdwg.mxu0
        %366 = vst [vmem:[%s256] sm:$0xff] %v358
        %367 = vst [vmem:[%s256 + $0x8] sm:$0xff] %v363
        %s368 = sand.u32 %s134, 1
        %s369 = scalar_lea.sflag [#allocation4], %s368
        %s370 = sand.u32 %s134, 1
        %s371 = smul.addr %s370, 16
        %s372 = scalar_lea.vmem [#allocation7], %s371
        // Predicated region
        $region41: #{tpu_custom_call.1} parent=31 // pred_check
          %p373 = pneg %p144
        $region42: #{tpu_custom_call.1} parent=31 // pred_check_branch
          %375 = sbr.rel (%p373) target = $region44
        $region43: #{tpu_custom_call.1} parent=31 // pred_region
          %s376 = sadd.s32 %s26, %s28
          %s377 = smul.u32 2, %s27
          %s379 = ssub.s32 256, 256
          %380 = vsyncadd %s369, %s379
          %s381 = smul.addr %s377, 2
          %s382 = sadd.s32 %s376, %s381
          %s383 = smul.addr %s382, 128
          %s384 = scalar_lea.hbm %s3, %s383
          %s385 = sshll.u32 %s372, 4
          %s386 = int_to_ptr.vmem [resolvable:$true] %s385
          %391 = dma.vmem_to_hbm [thread:$0]  %s386, 256, %s384, %s369, 128, 256, 8
        $region44: #{tpu_custom_call.1} parent=31 // pred_fallthru
          _
      $region32: #{tpu_custom_call.1} parent=5 // pred_fallthru
        _
      %p392 = scmp.le.s32.totalorder 2, %s16
      // Predicated region
      $region45: #{tpu_custom_call.1} parent=5 // pred_check
        %p393 = pneg %p392
      $region46: #{tpu_custom_call.1} parent=5 // pred_check_branch
        %395 = sbr.rel (%p393) target = $region48
      $region47: #{tpu_custom_call.1} parent=5 // pred_region
        %s396 = ssub.s32 %s16, 2
        // Predicated region
        $region49: #{tpu_custom_call.1} parent=47 // pred_check
          %p397 = pneg %p150
        $region50: #{tpu_custom_call.1} parent=47 // pred_check_branch
          %399 = sbr.rel (%p397) target = $region52
        $region51: #{tpu_custom_call.1} parent=47 // pred_region
          %s400 = sand.u32 %s135, 1
          %s401 = scalar_lea.sflag [#allocation4], %s400
          %s402 = sand.u32 %s135, 1
          %s403 = smul.addr %s402, 16
          %s404 = scalar_lea.vmem [#allocation7], %s403
          %405 = dma.done %s401, 256
        $region52: #{tpu_custom_call.1} parent=47 // pred_fallthru
          _
      $region48: #{tpu_custom_call.1} parent=5 // pred_fallthru
        _
    $region6: #{tpu_custom_call.1} parent=1 // loop_footer
      %s20 = sadd.s32 1, %s16
    $region7: #{tpu_custom_call.1} parent=1 // loop_footer_branch
      %15 = sbr.rel target = $region3
    $region8: #{tpu_custom_call.1} parent=1 // loop_exit
      _
    %406 = vsyncpa [#allocation3], 1
    %s407 = scalar_lea.sflag [#allocation3], 1
    %408 = vsyncpa %s407, 1
    %409 = vsyncpa [#allocation6], 1
    %s410 = scalar_lea.sflag [#allocation6], 1
    %411 = vsyncpa %s410, 1
    %412 = vsyncpa [#allocation4], 1
    %s413 = scalar_lea.sflag [#allocation4], 1
    %414 = vsyncpa %s413, 1

</llo_original>
